<compile_context>
chip_gen: v7x
topology: tpu7x:2x2x1
jax: 0.10.0
libtpu: 0.0.40
codegen_flags: <defaults>
</compile_context>

<pallas_src>
import functools

import jax
import jax.numpy as jnp
from jax.experimental import pallas as pl
from jax.experimental.pallas import tpu as pltpu

EPS = 1e-5
_VMEM_LIMIT_BYTES = 48 * 1024 * 1024    # raise scoped VMEM; safe on v5e/v6e/v7x
_TILE_BUDGET_BYTES = 4 * 1024 * 1024    # per-tile payload (~4 pipeline buffers live)


def _compiler_params(dimension_semantics):
    return pltpu.CompilerParams(
        dimension_semantics=dimension_semantics,
        vmem_limit_bytes=_VMEM_LIMIT_BYTES,
    )


# ---------------------------------------------------------------------------
# Path 1: single pass — one channel tile holds all of (N, H*W) for its channels.
# ---------------------------------------------------------------------------
def _bn_onepass_kernel(x_ref, o_ref, *, inv_count, eps):
    x = x_ref[...].astype(jnp.float32)                         # (N, C_TILE, HW)
    # Fused sum / sum-of-squares in one sweep (lane reduce, then major-axis add).
    s = jnp.sum(jnp.sum(x, axis=2, keepdims=True), axis=0, keepdims=True)
    ss = jnp.sum(jnp.sum(x * x, axis=2, keepdims=True), axis=0, keepdims=True)
    mean = s * inv_count                                       # (1, C_TILE, 1)
    var = ss * inv_count - mean * mean                         # biased variance
    inv_std = jax.lax.rsqrt(var + eps)                         # EUP path
    o_ref[...] = ((x - mean) * inv_std).astype(o_ref.dtype)


def _bn_onepass(x3, c_tile, eps):
    n, c, hw = x3.shape
    inv_count = 1.0 / float(n * hw)
    return pl.pallas_call(
        functools.partial(_bn_onepass_kernel, inv_count=inv_count, eps=eps),
        out_shape=jax.ShapeDtypeStruct((n, c, hw), x3.dtype),
        grid=(c // c_tile,),
        in_specs=[pl.BlockSpec((n, c_tile, hw), lambda ci: (0, ci, 0))],
        out_specs=pl.BlockSpec((n, c_tile, hw), lambda ci: (0, ci, 0)),
        compiler_params=_compiler_params(("parallel",)),
    )(x3)


# ---------------------------------------------------------------------------
# Path 2: two phase — stats accumulated over N, then a parallel normalize sweep.
# ---------------------------------------------------------------------------
def _bn_stats_kernel(x_ref, mean_ref, inv_std_ref, sum_ref, sq_ref, *,
                     inv_count, eps):
    ni = pl.program_id(1)

    @pl.when(ni == 0)
    def _init():
        sum_ref[...] = jnp.zeros_like(sum_ref)
        sq_ref[...] = jnp.zeros_like(sq_ref)

    x = x_ref[0].astype(jnp.float32)                           # (C_TILE, HW)
    sum_ref[...] += jnp.sum(x, axis=-1, keepdims=True)         # (C_TILE, 1)
    sq_ref[...] += jnp.sum(x * x, axis=-1, keepdims=True)

    @pl.when(ni == pl.num_programs(1) - 1)
    def _finalize():
        mean = sum_ref[...] * inv_count
        var = sq_ref[...] * inv_count - mean * mean            # biased variance
        mean_ref[...] = mean
        inv_std_ref[...] = jax.lax.rsqrt(var + eps)


def _bn_norm_kernel(x_ref, mean_ref, inv_std_ref, o_ref):
    x = x_ref[0].astype(jnp.float32)                           # (C_TILE, HW)
    y = (x - mean_ref[...]) * inv_std_ref[...]
    o_ref[0] = y.astype(o_ref.dtype)


def _bn_twophase(x3, c_tile, eps):
    n, c, hw = x3.shape
    inv_count = 1.0 / float(n * hw)
    grid = (c // c_tile, n)

    mean, inv_std = pl.pallas_call(
        functools.partial(_bn_stats_kernel, inv_count=inv_count, eps=eps),
        out_shape=(
            jax.ShapeDtypeStruct((c, 1), jnp.float32),
            jax.ShapeDtypeStruct((c, 1), jnp.float32),
        ),
        grid=grid,
        in_specs=[pl.BlockSpec((1, c_tile, hw), lambda ci, ni: (ni, ci, 0))],
        out_specs=(
            pl.BlockSpec((c_tile, 1), lambda ci, ni: (ci, 0)),
            pl.BlockSpec((c_tile, 1), lambda ci, ni: (ci, 0)),
        ),
        scratch_shapes=[
            pltpu.VMEM((c_tile, 1), jnp.float32),
            pltpu.VMEM((c_tile, 1), jnp.float32),
        ],
        compiler_params=_compiler_params(("parallel", "arbitrary")),
    )(x3)

    return pl.pallas_call(
        _bn_norm_kernel,
        out_shape=jax.ShapeDtypeStruct((n, c, hw), x3.dtype),
        grid=grid,
        in_specs=[
            pl.BlockSpec((1, c_tile, hw), lambda ci, ni: (ni, ci, 0)),
            pl.BlockSpec((c_tile, 1), lambda ci, ni: (ci, 0)),
            pl.BlockSpec((c_tile, 1), lambda ci, ni: (ci, 0)),
        ],
        out_specs=pl.BlockSpec((1, c_tile, hw), lambda ci, ni: (ni, ci, 0)),
        compiler_params=_compiler_params(("parallel", "parallel")),
    )(x3, mean, inv_std)


def _channel_tile_candidates(c, itemsize):
    """Channel tiles satisfying the (8,128) rule on the sublane axis:
    multiples of the dtype sublane packing that divide C, plus full C."""
    mult = {4: 8, 2: 16, 1: 32}.get(itemsize, 8)
    cands = [t for t in range(mult, c + 1, mult) if c % t == 0]
    if c not in cands:
        cands.append(c)
    return sorted(set(cands), reverse=True)   # largest first


def batch_norm_2d(x, eps=EPS, tile_budget_bytes=_TILE_BUDGET_BYTES):
    """x: (N, C, H, W). Training-mode BatchNorm2d(affine=False); same shape/dtype."""
    n, c, h, w = x.shape
    hw = h * w
    x3 = x.reshape(n, c, hw)                  # free reshape, no transpose
    itemsize = jnp.dtype(x.dtype).itemsize
    cands = _channel_tile_candidates(c, itemsize)

    # Single-pass: largest channel tile whose full (N, C_TILE, HW) slab fits VMEM.
    for ct in cands:
        if n * ct * hw * itemsize <= tile_budget_bytes:
            return _bn_onepass(x3, ct, eps).reshape(n, c, h, w)

    # Two-phase fallback: largest channel tile whose (1, C_TILE, HW) slab fits.
    c_tile = cands[-1]
    for ct in cands:
        if ct * hw * itemsize <= tile_budget_bytes:
            c_tile = ct
            break
    # TODO(synk): if even a single (1, c_tile, HW) slab exceeds VMEM, also tile HW.
    return _bn_twophase(x3, c_tile, eps).reshape(n, c, h, w)


if __name__ == "__main__":
    key = jax.random.PRNGKey(0)

    def ref_bn(x):
        mean = jnp.mean(x, axis=(0, 2, 3), keepdims=True)
        var = jnp.mean((x - mean) ** 2, axis=(0, 2, 3), keepdims=True)
        return (x - mean) / jnp.sqrt(var + EPS)

    # Small shape implied by the module's forward (NCHW activations).
    x = jax.random.normal(key, (2, 4, 16, 16), dtype=jnp.float32)
    out = jax.block_until_ready(batch_norm_2d(x))
    assert out.shape == x.shape and out.dtype == x.dtype
    assert jnp.allclose(out, ref_bn(x), atol=1e-4, rtol=1e-4), "single-pass mismatch"

    # Exercise the two-phase (large-activation) path by shrinking the tile budget.
    x2 = jax.random.normal(jax.random.split(key)[0], (2, 8, 16, 16), dtype=jnp.float32)
    out2 = jax.block_until_ready(batch_norm_2d(x2, tile_budget_bytes=8 * 1024))
    assert jnp.allclose(out2, ref_bn(x2), atol=1e-4, rtol=1e-4), "two-phase mismatch"

    print("KERNEL_OK")
</pallas_src>

<mosaic_0001>
module attributes {stable_mosaic.version = 11 : i64} {
  func.func @_bn_onepass_kernel(%arg0: i32, %arg1: memref<2x4x256xf32, #tpu.memory_space<vmem>>, %arg2: memref<2x4x256xf32, #tpu.memory_space<vmem>>) attributes {dimension_semantics = [#tpu.dimension_semantics<parallel>], iteration_bounds = array<i64: 1>, scalar_prefetch = 0 : i64, scratch_operands = 0 : i64, tpu.core_type = #tpu.core_type<tc>, window_params = [{transform_indices = @transform_0, window_bounds = array<i64: 2, 4, 256>}, {transform_indices = @transform_1, window_bounds = array<i64: 2, 4, 256>}]} {
    %c0 = arith.constant 0 : index
    %c0_0 = arith.constant 0 : index
    %c0_1 = arith.constant 0 : index
    %0 = vector.load %arg1[%c0, %c0_0, %c0_1] : memref<2x4x256xf32, #tpu.memory_space<vmem>>, vector<2x4x256xf32>
    %cst = arith.constant dense<0.000000e+00> : vector<2x4xf32>
    %1 = vector.multi_reduction <add>, %0, %cst [2] : vector<2x4x256xf32> to vector<2x4xf32>
    %2 = vector.shape_cast %1 : vector<2x4xf32> to vector<2x4x1xf32>
    %cst_2 = arith.constant dense<0.000000e+00> : vector<4x1xf32>
    %3 = vector.multi_reduction <add>, %2, %cst_2 [0] : vector<2x4x1xf32> to vector<4x1xf32>
    %4 = vector.shape_cast %3 : vector<4x1xf32> to vector<1x4x1xf32>
    %5 = arith.mulf %0, %0 : vector<2x4x256xf32>
    %cst_3 = arith.constant dense<0.000000e+00> : vector<2x4xf32>
    %6 = vector.multi_reduction <add>, %5, %cst_3 [2] : vector<2x4x256xf32> to vector<2x4xf32>
    %7 = vector.shape_cast %6 : vector<2x4xf32> to vector<2x4x1xf32>
    %cst_4 = arith.constant dense<0.000000e+00> : vector<4x1xf32>
    %8 = vector.multi_reduction <add>, %7, %cst_4 [0] : vector<2x4x1xf32> to vector<4x1xf32>
    %9 = vector.shape_cast %8 : vector<4x1xf32> to vector<1x4x1xf32>
    %cst_5 = arith.constant 0.001953125 : f32
    %10 = vector.broadcast %cst_5 : f32 to vector<1x4x1xf32>
    %11 = arith.mulf %4, %10 : vector<1x4x1xf32>
    %cst_6 = arith.constant 0.001953125 : f32
    %12 = vector.broadcast %cst_6 : f32 to vector<1x4x1xf32>
    %13 = arith.mulf %9, %12 : vector<1x4x1xf32>
    %14 = arith.mulf %11, %11 : vector<1x4x1xf32>
    %15 = arith.subf %13, %14 : vector<1x4x1xf32>
    %cst_7 = arith.constant 9.99999974E-6 : f32
    %16 = vector.broadcast %cst_7 : f32 to vector<1x4x1xf32>
    %17 = arith.addf %15, %16 : vector<1x4x1xf32>
    %18 = math.rsqrt %17 : vector<1x4x1xf32>
    %19 = vector.broadcast %11 : vector<1x4x1xf32> to vector<2x4x256xf32>
    %20 = arith.subf %0, %19 : vector<2x4x256xf32>
    %21 = vector.broadcast %18 : vector<1x4x1xf32> to vector<2x4x256xf32>
    %22 = arith.mulf %20, %21 : vector<2x4x256xf32>
    %c0_8 = arith.constant 0 : index
    %c0_9 = arith.constant 0 : index
    %c0_10 = arith.constant 0 : index
    %23 = vector.load %arg2[%c0_8, %c0_9, %c0_10] : memref<2x4x256xf32, #tpu.memory_space<vmem>>, vector<2x4x256xf32>
    tpu.vector_store %arg2[%c0_8, %c0_9, %c0_10], %22 {strides = array<i32>} : memref<2x4x256xf32, #tpu.memory_space<vmem>>, vector<2x4x256xf32>,
    return
  }
  func.func @transform_0(%arg0: i32) -> (i32, i32, i32) {
    %c0_i32 = arith.constant 0 : i32
    %c0_i32_0 = arith.constant 0 : i32
    %c0_i32_1 = arith.constant 0 : i32
    return %c0_i32, %arg0, %c0_i32_0 : i32, i32, i32
  }
  func.func @transform_1(%arg0: i32) -> (i32, i32, i32) {
    %c0_i32 = arith.constant 0 : i32
    %c0_i32_0 = arith.constant 0 : i32
    %c0_i32_1 = arith.constant 0 : i32
    return %c0_i32, %arg0, %c0_i32_0 : i32, i32, i32
  }
}

</mosaic_0001>

<llo_original>
// kernel: tpu_custom_call.1
$region0: #{tpu_custom_call.1}
  #allocation0 [shape = 'u32[]', space=smem, size = 0x4, offset = 0x4, fixed_abs, tag = 'smem constant byte address 0x4 - core index']
  #allocation1 [shape = 'u32[144,128]{1,0:T(1,128)}', space=vmem, size = 0x12000, scoped, tag = 'internal scratch']
  %s0 = inlined_call_operand.hbm [shape: f32[2,4,256], index: 0, kind: input, shape index: {}]
  %s1 = inlined_call_operand.hbm [shape: f32[2,4,256], index: 1, kind: output, shape index: {}]
  %s2 = sld [smem:[#allocation0]]
  $region18: #{tpu_custom_call.1} parent=0
    _
  %s4 = ssub.s32 1, %s2
  %s5 = scalar_select 0, %s4, %s2
  $region1: #{tpu_custom_call.1} parent=0
    #allocation2 [shape = 'u8[8192]{0}', space=vmem, size = 0x2000, scoped, tag = 'input window, operand 0, single buffered']
    #allocation3 [shape = 's32[1]{0}', space=sflag, size = 0x4, scoped, tag = 'scoped memory for tpu_custom_call.1']
    #allocation4 [shape = 's32[1]{0}', space=sflag, size = 0x4, scoped, tag = 'scoped memory for tpu_custom_call.1']
    #allocation5 [shape = 'u8[8192]{0}', space=vmem, size = 0x2000, scoped, tag = 'output window, operand 0, single buffered']
    %6 = vsyncpa [#allocation3], 0
    %7 = vsyncpa [#allocation4], 0
    // Predicated region
    $region2: #{tpu_custom_call.1} parent=1 // pred_check
      _
    $region3: #{tpu_custom_call.1} parent=1 // pred_check_branch
      %9 = sbr.rel (0) target = $region5
    $region4: #{tpu_custom_call.1} parent=1 // pred_region
      %s11 = ssub.s32 256, 256
      %12 = vsyncadd [#allocation3], %s11
      %s13 = sshll.u32 [#allocation2], 4
      %s14 = int_to_ptr.vmem [resolvable:$true] %s13
      %19 = dma.hbm_to_vmem [thread:$0]  %s0, 256, %s14, [#allocation3], 128, 128, 8
    $region5: #{tpu_custom_call.1} parent=1 // pred_fallthru
      _
    // Predicated region
    $region6: #{tpu_custom_call.1} parent=1 // pred_check
      _
    $region7: #{tpu_custom_call.1} parent=1 // pred_check_branch
      %21 = sbr.rel (0) target = $region9
    $region8: #{tpu_custom_call.1} parent=1 // pred_region
      %22 = dma.done [#allocation3], 256
    $region9: #{tpu_custom_call.1} parent=1 // pred_fallthru
      _
    %v23 = vld [vmem:[#allocation2] sm:$0xff]
    %v24 = vld [vmem:[#allocation2 + $0x8] sm:$0xff]
    %v27 = vcombine.high %v23, %v23
    %v28 = vcombine.high %v24, %v24
    %vm31 = vcmask 1043456
    %v32 = vsel %vm31, %v23, 0.0
    %v33 = vsel %vm31, %v27, 0.0
    %v34 = vadd.f32 %v32, %v33
    %35 = vadd.xlane.f32.xlu0 %v34
    %v36 = vpop.xlane.xlu0 %35
    %v37 = vsel %vm31, %v24, 0.0
    %v38 = vsel %vm31, %v28, 0.0
    %v39 = vadd.f32 %v37, %v38
    %40 = vadd.xlane.f32.xlu0 %v39
    %v41 = vpop.xlane.xlu0 %40
    %v42 = vsel %vm31, %v36, 0.0
    %v43 = vsel %vm31, %v41, 0.0
    %v44 = vadd.f32 %v42, %v43
    %v45 = vmul.f32 %v23, %v23
    %v46 = vmul.f32 %v24, %v24
    %v49 = vcombine.high %v45, %v45
    %v50 = vcombine.high %v46, %v46
    %v53 = vsel %vm31, %v45, 0.0
    %v54 = vsel %vm31, %v49, 0.0
    %v55 = vadd.f32 %v53, %v54
    %56 = vadd.xlane.f32.xlu0 %v55
    %v57 = vpop.xlane.xlu0 %56
    %v58 = vsel %vm31, %v46, 0.0
    %v59 = vsel %vm31, %v50, 0.0
    %v60 = vadd.f32 %v58, %v59
    %61 = vadd.xlane.f32.xlu0 %v60
    %v62 = vpop.xlane.xlu0 %61
    %v63 = vsel %vm31, %v57, 0.0
    %v64 = vsel %vm31, %v62, 0.0
    %v65 = vadd.f32 %v63, %v64
    %v66 = vmul.f32 %v44, 0.001953125
    %v67 = vmul.f32 %v65, 0.001953125
    %v68 = vmul.f32 %v66, %v66
    %v69 = vsub.f32 %v67, %v68
    %v70 = vadd.f32 %v69, 1e-05
    %v71 = vrsqrt.pop %v70
    %v74 = vunpack.c.l.s4 839922192
    %v75 = vunpack.c.0.s8 %v74
    %v76 = vlaneseq
    %v77 = vshrl.u32 %v76, 7
    %v78 = vsub.s32 %v75, %v77
    %v79 = vrot.slane %v66, %v78
    %v81 = vsub.f32 %v23, %v79
    %v82 = vsub.f32 %v24, %v79
    %v85 = vunpack.c.l.s4 839922192
    %v86 = vunpack.c.0.s8 %v85
    %v87 = vlaneseq
    %v88 = vshrl.u32 %v87, 7
    %v89 = vsub.s32 %v86, %v88
    %v90 = vrot.slane %v71, %v89
    %v92 = vmul.f32 %v81, %v90
    %v93 = vmul.f32 %v82, %v90
    %94 = vst [vmem:[#allocation5] sm:$0xff] %v92
    %95 = vst [vmem:[#allocation5 + $0x8] sm:$0xff] %v93
    // Predicated region
    $region10: #{tpu_custom_call.1} parent=1 // pred_check
      _
    $region11: #{tpu_custom_call.1} parent=1 // pred_check_branch
      %97 = sbr.rel (0) target = $region13
    $region12: #{tpu_custom_call.1} parent=1 // pred_region
      %s99 = ssub.s32 256, 256
      %100 = vsyncadd [#allocation4], %s99
      %s101 = sshll.u32 [#allocation5], 4
      %s102 = int_to_ptr.vmem [resolvable:$true] %s101
      %107 = dma.vmem_to_hbm [thread:$0]  %s102, 256, %s1, [#allocation4], 128, 128, 8
    $region13: #{tpu_custom_call.1} parent=1 // pred_fallthru
      _
    // Predicated region
    $region14: #{tpu_custom_call.1} parent=1 // pred_check
      _
    $region15: #{tpu_custom_call.1} parent=1 // pred_check_branch
      %109 = sbr.rel (0) target = $region17
    $region16: #{tpu_custom_call.1} parent=1 // pred_region
      %110 = dma.done [#allocation4], 256
    $region17: #{tpu_custom_call.1} parent=1 // pred_fallthru
      _
    %111 = vsyncpa [#allocation3], 1
    %112 = vsyncpa [#allocation4], 1

</llo_original>
